<compile_context>
chip_gen: v5e
topology: v5e:2x2
jax: 0.10.0
libtpu: 0.0.40
codegen_flags: <defaults>
</compile_context>

<pallas_src>
import functools

import jax
import jax.numpy as jnp
import numpy as np
from jax import lax
from jax.experimental import pallas as pl
from jax.experimental.pallas import tpu as pltpu


# ------------------------------------------------------------------ kernel ---

def _gelu_exact(v):
    # torch.nn.GELU() default: exact erf formulation (VALU polynomial on TPU).
    return 0.5 * v * (1.0 + lax.erf(v * 0.7071067811865476))


def _gelu_tanh(v):
    # tanh approximation: the transcendental runs on the EUP slot, freeing the VALU
    # (the binding unit for this tiny-K kernel). ~1e-3 abs deviation vs exact erf.
    c = 0.7978845608028654  # sqrt(2/pi)
    return 0.5 * v * (1.0 + jnp.tanh(c * (v + 0.044715 * v * v * v)))


def _embedder_kernel(num_blocks, compute_dtype, gelu,
                     x_ref, w_in_ref, b_in_ref, wb_ref, bb_ref,
                     w_out_ref, b_out_ref, o_ref):
    # x tile: [tm, d_in]; matmul operands in compute_dtype, accumulation in f32;
    # bias / GELU / residual math stays in f32.
    x = x_ref[...].astype(compute_dtype)

    # linear_in + GELU
    h = jnp.dot(x, w_in_ref[...], preferred_element_type=jnp.float32) + b_in_ref[...]
    h = gelu(h)

    # resnet blocks (num_blocks is small & compile-time constant -> static unroll;
    # switch to lax.fori_loop with dynamic wb_ref[2*i] indexing if num_blocks grows >~4)
    for blk in range(num_blocks):
        h0 = h
        t = gelu(h)  # matches torch: each block re-applies act() to its input
        t = jnp.dot(t.astype(compute_dtype), wb_ref[2 * blk],
                    preferred_element_type=jnp.float32) + bb_ref[2 * blk]
        t = gelu(t)
        t = jnp.dot(t.astype(compute_dtype), wb_ref[2 * blk + 1],
                    preferred_element_type=jnp.float32) + bb_ref[2 * blk + 1]
        h = t + h0

    # linear_out: stores at the true d_out width (masked vst if d_out < 128, but no
    # lane padding -> no extra HBM write bytes and no post-kernel slice pass).
    out = jnp.dot(h.astype(compute_dtype), w_out_ref[...],
                  preferred_element_type=jnp.float32) + b_out_ref[...]
    o_ref[...] = out.astype(o_ref.dtype)


# ----------------------------------------------------------------- wrapper ---

def prepare_params(params, compute_dtype=jnp.bfloat16):
    """One-time parameter prep, hoisted off the hot path: cast matmul weights to the
    compute dtype (bf16 by default; f32 for exact torch numerics). Biases stay f32
    since they are added to the f32 accumulator."""
    w_in, b_in, wb, bb, w_out, b_out = params
    return (w_in.astype(compute_dtype), b_in.astype(jnp.float32),
            wb.astype(compute_dtype), bb.astype(jnp.float32),
            w_out.astype(compute_dtype), b_out.astype(jnp.float32))


def _pick_tm(n):
    """Row-tile size: big enough to amortize the ~0.35us/grid-step overhead and fill
    the MXU M dim, but chosen so large inputs keep >= 2 grid steps (v7x megacore).
    VMEM stays tiny (~2-3 MiB at tm=2048) so no vmem_limit override is needed."""
    n8 = max(8, ((n + 7) // 8) * 8)
    if n8 <= 512:
        return n8                                    # single grid step for tiny inputs
    half = ((n + 1) // 2 + 255) // 256 * 256         # >= 2 steps, multiple of 256
    return min(2048, max(512, half))


def pseudo_residue_embedder(x, prepared_params, *, tm=None, use_tanh_gelu=True,
                            out_dtype=jnp.float32):
    """x: [..., d_in] -> [..., d_out]. `prepared_params` from prepare_params()."""
    w_in, b_in, wb, bb, w_out, b_out = prepared_params
    compute_dtype = w_in.dtype
    d_in, d_hidden = w_in.shape
    d_out = w_out.shape[1]
    num_blocks = wb.shape[0] // 2

    lead_shape = x.shape[:-1]
    n = int(np.prod(lead_shape)) if lead_shape else 1
    x2 = x.reshape(n, d_in)

    if tm is None:
        tm = _pick_tm(n)
    grid = ((n + tm - 1) // tm,)   # ragged last row block is masked by Pallas (no jnp.pad)

    gelu = _gelu_tanh if use_tanh_gelu else _gelu_exact
    kernel = functools.partial(_embedder_kernel, num_blocks, compute_dtype, gelu)

    # Advisory cost estimate so XLA schedules the surrounding reshape around the call.
    flops = 2 * n * (d_in * d_hidden
                     + 2 * num_blocks * d_hidden * d_hidden
                     + d_hidden * d_out)
    transcendentals = n * d_hidden * (2 * num_blocks + 1)
    weight_bytes = int((w_in.size + wb.size + w_out.size) * w_in.dtype.itemsize
                       + (b_in.size + bb.size + b_out.size) * 4)
    bytes_accessed = int(n * (d_in * x2.dtype.itemsize
                              + d_out * jnp.dtype(out_dtype).itemsize) + weight_bytes)

    out = pl.pallas_call(
        kernel,
        out_shape=jax.ShapeDtypeStruct((n, d_out), out_dtype),
        grid_spec=pl.GridSpec(
            grid=grid,
            in_specs=[
                pl.BlockSpec((tm, d_in), lambda i: (i, 0)),                  # x tile
                pl.BlockSpec((d_in, d_hidden), lambda i: (0, 0)),            # w_in
                pl.BlockSpec((1, d_hidden), lambda i: (0, 0)),               # b_in
                pl.BlockSpec((2 * num_blocks, d_hidden, d_hidden),
                             lambda i: (0, 0, 0)),                           # block weights
                pl.BlockSpec((2 * num_blocks, 1, d_hidden),
                             lambda i: (0, 0, 0)),                           # block biases
                pl.BlockSpec((d_hidden, d_out), lambda i: (0, 0)),           # w_out
                pl.BlockSpec((1, d_out), lambda i: (0, 0)),                  # b_out
            ],
            out_specs=pl.BlockSpec((tm, d_out), lambda i: (i, 0)),
        ),
        compiler_params=pltpu.CompilerParams(
            dimension_semantics=("parallel",)),
        cost_estimate=pl.CostEstimate(flops=flops,
                                      transcendentals=transcendentals,
                                      bytes_accessed=bytes_accessed),
    )(x2, w_in, b_in, wb, bb, w_out, b_out)

    return out.reshape(*lead_shape, d_out)


# --------------------------------------------------------- reference (JAX) ---

def pseudo_residue_embedder_ref(x, params, *, compute_dtype=jnp.float32,
                                use_tanh_gelu=False):
    """Pure-JAX reference. compute_dtype=f32 + use_tanh_gelu=False reproduces the torch
    module semantics; bf16 + tanh mirrors the kernel's default fast path."""
    w_in, b_in, wb, bb, w_out, b_out = params
    num_blocks = wb.shape[0] // 2
    gelu = _gelu_tanh if use_tanh_gelu else _gelu_exact
    prec = lax.Precision.HIGHEST if compute_dtype == jnp.float32 else None

    def dot(a, b):
        return jnp.dot(a.astype(compute_dtype), b.astype(compute_dtype),
                       preferred_element_type=jnp.float32, precision=prec)

    h = gelu(dot(x.astype(jnp.float32), w_in) + b_in[0])
    for blk in range(num_blocks):
        h0 = h
        t = dot(gelu(h), wb[2 * blk]) + bb[2 * blk, 0]
        t = dot(gelu(t), wb[2 * blk + 1]) + bb[2 * blk + 1, 0]
        h = t + h0
    return dot(h, w_out) + b_out[0]


# -------------------------------------------------------------------- main ---

def make_params(key, d_in, d_hidden, d_out, num_blocks):
    ks = jax.random.split(key, 6)
    scale = 0.1
    w_in = scale * jax.random.normal(ks[0], (d_in, d_hidden), jnp.float32)
    b_in = scale * jax.random.normal(ks[1], (1, d_hidden), jnp.float32)
    wb = scale * jax.random.normal(ks[2], (2 * num_blocks, d_hidden, d_hidden),
                                   jnp.float32)
    bb = scale * jax.random.normal(ks[3], (2 * num_blocks, 1, d_hidden), jnp.float32)
    w_out = scale * jax.random.normal(ks[4], (d_hidden, d_out), jnp.float32)
    b_out = scale * jax.random.normal(ks[5], (1, d_out), jnp.float32)
    return (w_in, b_in, wb, bb, w_out, b_out)


if __name__ == "__main__":
    d_in, d_hidden, d_out, num_blocks = 32, 64, 48, 2

    key = jax.random.PRNGKey(0)
    k_x1, k_x2, k_p = jax.random.split(key, 3)
    params = make_params(k_p, d_in, d_hidden, d_out, num_blocks)

    # ---- fast path: bf16 matmuls + tanh-GELU (default) ----------------------
    prepared_bf16 = prepare_params(params, compute_dtype=jnp.bfloat16)

    x = jax.random.normal(k_x1, (2, 4, d_in), jnp.float32)       # [*, d_in]
    out = jax.block_until_ready(pseudo_residue_embedder(x, prepared_bf16))

    # Tight structural check against a reference with matching bf16/tanh semantics.
    ref_match = pseudo_residue_embedder_ref(
        x.reshape(-1, d_in), params, compute_dtype=jnp.bfloat16,
        use_tanh_gelu=True).reshape(out.shape)
    np.testing.assert_allclose(np.asarray(out), np.asarray(ref_match),
                               rtol=2e-3, atol=2e-3)

    # Loose sanity check against exact torch (f32 + erf) semantics.
    ref_torch = pseudo_residue_embedder_ref(x.reshape(-1, d_in), params).reshape(out.shape)
    np.testing.assert_allclose(np.asarray(out), np.asarray(ref_torch),
                               rtol=1e-1, atol=1e-1)

    # Ragged row count (n=15, tm=16): exercises Pallas' masked last row block
    # (no jnp.pad of x, no post-kernel slice).
    x_rag = jax.random.normal(k_x2, (3, 5, d_in), jnp.float32)
    out_rag = jax.block_until_ready(pseudo_residue_embedder(x_rag, prepared_bf16))
    ref_rag = pseudo_residue_embedder_ref(
        x_rag.reshape(-1, d_in), params, compute_dtype=jnp.bfloat16,
        use_tanh_gelu=True).reshape(out_rag.shape)
    np.testing.assert_allclose(np.asarray(out_rag), np.asarray(ref_rag),
                               rtol=2e-3, atol=2e-3)

    # ---- torch-parity path: f32 matmuls + exact erf GELU ---------------------
    prepared_f32 = prepare_params(params, compute_dtype=jnp.float32)
    out_exact = jax.block_until_ready(
        pseudo_residue_embedder(x, prepared_f32, use_tanh_gelu=False))
    np.testing.assert_allclose(np.asarray(out_exact), np.asarray(ref_torch),
                               rtol=2e-2, atol=2e-2)

    print("KERNEL_OK")
</pallas_src>

<mosaic_0001>
module attributes {stable_mosaic.version = 11 : i64} {
  func.func @_embedder_kernel(%arg0: i32, %arg1: memref<8x32xf32, #tpu.memory_space<vmem>>, %arg2: memref<32x64xbf16, #tpu.memory_space<vmem>>, %arg3: memref<1x64xf32, #tpu.memory_space<vmem>>, %arg4: memref<4x64x64xbf16, #tpu.memory_space<vmem>>, %arg5: memref<4x1x64xf32, #tpu.memory_space<vmem>>, %arg6: memref<64x48xbf16, #tpu.memory_space<vmem>>, %arg7: memref<1x48xf32, #tpu.memory_space<vmem>>, %arg8: memref<8x48xf32, #tpu.memory_space<vmem>>) attributes {dimension_semantics = [#tpu.dimension_semantics<parallel>], iteration_bounds = array<i64: 1>, scalar_prefetch = 0 : i64, scratch_operands = 0 : i64, tpu.core_type = #tpu.core_type<tc>, window_params = [{transform_indices = @transform_0, window_bounds = array<i64: 8, 32>}, {pipeline_mode = #tpu.pipeline_mode<synchronous>, transform_indices = @transform_1, window_bounds = array<i64: 32, 64>}, {pipeline_mode = #tpu.pipeline_mode<synchronous>, transform_indices = @transform_2, window_bounds = array<i64: 1, 64>}, {pipeline_mode = #tpu.pipeline_mode<synchronous>, transform_indices = @transform_3, window_bounds = array<i64: 4, 64, 64>}, {pipeline_mode = #tpu.pipeline_mode<synchronous>, transform_indices = @transform_4, window_bounds = array<i64: 4, 1, 64>}, {pipeline_mode = #tpu.pipeline_mode<synchronous>, transform_indices = @transform_5, window_bounds = array<i64: 64, 48>}, {pipeline_mode = #tpu.pipeline_mode<synchronous>, transform_indices = @transform_6, window_bounds = array<i64: 1, 48>}, {transform_indices = @transform_7, window_bounds = array<i64: 8, 48>}]} {
    %c0 = arith.constant 0 : index
    %c0_0 = arith.constant 0 : index
    %0 = vector.load %arg1[%c0, %c0_0] : memref<8x32xf32, #tpu.memory_space<vmem>>, vector<8x32xf32>
    %1 = arith.truncf %0 : vector<8x32xf32> to vector<8x32xbf16>
    %c0_1 = arith.constant 0 : index
    %c0_2 = arith.constant 0 : index
    %2 = vector.load %arg2[%c0_1, %c0_2] : memref<32x64xbf16, #tpu.memory_space<vmem>>, vector<32x64xbf16>
    %cst = arith.constant dense<0.000000e+00> : vector<8x64xf32>
    %3 = tpu.matmul %1, %2, %cst {dimension_numbers = #tpu.dot_dimension_numbers<[1], [0], [0], [1], [0, 0, 1, 1], [], []>} : vector<8x32xbf16>, vector<32x64xbf16>, vector<8x64xf32> -> vector<8x64xf32>
    %c0_3 = arith.constant 0 : index
    %c0_4 = arith.constant 0 : index
    %4 = vector.load %arg3[%c0_3, %c0_4] : memref<1x64xf32, #tpu.memory_space<vmem>>, vector<1x64xf32>
    %5 = vector.broadcast %4 : vector<1x64xf32> to vector<8x64xf32>
    %6 = arith.addf %3, %5 : vector<8x64xf32>
    %cst_5 = arith.constant 5.000000e-01 : f32
    %7 = vector.broadcast %cst_5 : f32 to vector<8x64xf32>
    %8 = arith.mulf %7, %6 : vector<8x64xf32>
    %cst_6 = arith.constant 4.471500e-02 : f32
    %9 = vector.broadcast %cst_6 : f32 to vector<8x64xf32>
    %10 = arith.mulf %9, %6 : vector<8x64xf32>
    %11 = arith.mulf %10, %6 : vector<8x64xf32>
    %12 = arith.mulf %11, %6 : vector<8x64xf32>
    %13 = arith.addf %6, %12 : vector<8x64xf32>
    %cst_7 = arith.constant 0.797884583 : f32
    %14 = vector.broadcast %cst_7 : f32 to vector<8x64xf32>
    %15 = arith.mulf %14, %13 : vector<8x64xf32>
    %16 = math.tanh %15 : vector<8x64xf32>
    %cst_8 = arith.constant 1.000000e+00 : f32
    %17 = vector.broadcast %cst_8 : f32 to vector<8x64xf32>
    %18 = arith.addf %17, %16 : vector<8x64xf32>
    %19 = arith.mulf %8, %18 : vector<8x64xf32>
    %cst_9 = arith.constant 5.000000e-01 : f32
    %20 = vector.broadcast %cst_9 : f32 to vector<8x64xf32>
    %21 = arith.mulf %20, %19 : vector<8x64xf32>
    %cst_10 = arith.constant 4.471500e-02 : f32
    %22 = vector.broadcast %cst_10 : f32 to vector<8x64xf32>
    %23 = arith.mulf %22, %19 : vector<8x64xf32>
    %24 = arith.mulf %23, %19 : vector<8x64xf32>
    %25 = arith.mulf %24, %19 : vector<8x64xf32>
    %26 = arith.addf %19, %25 : vector<8x64xf32>
    %cst_11 = arith.constant 0.797884583 : f32
    %27 = vector.broadcast %cst_11 : f32 to vector<8x64xf32>
    %28 = arith.mulf %27, %26 : vector<8x64xf32>
    %29 = math.tanh %28 : vector<8x64xf32>
    %cst_12 = arith.constant 1.000000e+00 : f32
    %30 = vector.broadcast %cst_12 : f32 to vector<8x64xf32>
    %31 = arith.addf %30, %29 : vector<8x64xf32>
    %32 = arith.mulf %21, %31 : vector<8x64xf32>
    %33 = arith.truncf %32 : vector<8x64xf32> to vector<8x64xbf16>
    %c0_13 = arith.constant 0 : index
    %c0_14 = arith.constant 0 : index
    %c0_15 = arith.constant 0 : index
    %34 = vector.load %arg4[%c0_13, %c0_14, %c0_15] : memref<4x64x64xbf16, #tpu.memory_space<vmem>>, vector<1x64x64xbf16>
    %35 = vector.shape_cast %34 : vector<1x64x64xbf16> to vector<64x64xbf16>
    %cst_16 = arith.constant dense<0.000000e+00> : vector<8x64xf32>
    %36 = tpu.matmul %33, %35, %cst_16 {dimension_numbers = #tpu.dot_dimension_numbers<[1], [0], [0], [1], [0, 0, 1, 1], [], []>} : vector<8x64xbf16>, vector<64x64xbf16>, vector<8x64xf32> -> vector<8x64xf32>
    %c0_17 = arith.constant 0 : index
    %c0_18 = arith.constant 0 : index
    %c0_19 = arith.constant 0 : index
    %37 = vector.load %arg5[%c0_17, %c0_18, %c0_19] : memref<4x1x64xf32, #tpu.memory_space<vmem>>, vector<1x1x64xf32>
    %38 = vector.shape_cast %37 : vector<1x1x64xf32> to vector<1x64xf32>
    %39 = vector.broadcast %38 : vector<1x64xf32> to vector<8x64xf32>
    %40 = arith.addf %36, %39 : vector<8x64xf32>
    %cst_20 = arith.constant 5.000000e-01 : f32
    %41 = vector.broadcast %cst_20 : f32 to vector<8x64xf32>
    %42 = arith.mulf %41, %40 : vector<8x64xf32>
    %cst_21 = arith.constant 4.471500e-02 : f32
    %43 = vector.broadcast %cst_21 : f32 to vector<8x64xf32>
    %44 = arith.mulf %43, %40 : vector<8x64xf32>
    %45 = arith.mulf %44, %40 : vector<8x64xf32>
    %46 = arith.mulf %45, %40 : vector<8x64xf32>
    %47 = arith.addf %40, %46 : vector<8x64xf32>
    %cst_22 = arith.constant 0.797884583 : f32
    %48 = vector.broadcast %cst_22 : f32 to vector<8x64xf32>
    %49 = arith.mulf %48, %47 : vector<8x64xf32>
    %50 = math.tanh %49 : vector<8x64xf32>
    %cst_23 = arith.constant 1.000000e+00 : f32
    %51 = vector.broadcast %cst_23 : f32 to vector<8x64xf32>
    %52 = arith.addf %51, %50 : vector<8x64xf32>
    %53 = arith.mulf %42, %52 : vector<8x64xf32>
    %54 = arith.truncf %53 : vector<8x64xf32> to vector<8x64xbf16>
    %c1 = arith.constant 1 : index
    %c0_24 = arith.constant 0 : index
    %c0_25 = arith.constant 0 : index
    %55 = vector.load %arg4[%c1, %c0_24, %c0_25] : memref<4x64x64xbf16, #tpu.memory_space<vmem>>, vector<1x64x64xbf16>
    %56 = vector.shape_cast %55 : vector<1x64x64xbf16> to vector<64x64xbf16>
    %cst_26 = arith.constant dense<0.000000e+00> : vector<8x64xf32>
    %57 = tpu.matmul %54, %56, %cst_26 {dimension_numbers = #tpu.dot_dimension_numbers<[1], [0], [0], [1], [0, 0, 1, 1], [], []>} : vector<8x64xbf16>, vector<64x64xbf16>, vector<8x64xf32> -> vector<8x64xf32>
    %c1_27 = arith.constant 1 : index
    %c0_28 = arith.constant 0 : index
    %c0_29 = arith.constant 0 : index
    %58 = vector.load %arg5[%c1_27, %c0_28, %c0_29] : memref<4x1x64xf32, #tpu.memory_space<vmem>>, vector<1x1x64xf32>
    %59 = vector.shape_cast %58 : vector<1x1x64xf32> to vector<1x64xf32>
    %60 = vector.broadcast %59 : vector<1x64xf32> to vector<8x64xf32>
    %61 = arith.addf %57, %60 : vector<8x64xf32>
    %62 = arith.addf %61, %19 : vector<8x64xf32>
    %cst_30 = arith.constant 5.000000e-01 : f32
    %63 = vector.broadcast %cst_30 : f32 to vector<8x64xf32>
    %64 = arith.mulf %63, %62 : vector<8x64xf32>
    %cst_31 = arith.constant 4.471500e-02 : f32
    %65 = vector.broadcast %cst_31 : f32 to vector<8x64xf32>
    %66 = arith.mulf %65, %62 : vector<8x64xf32>
    %67 = arith.mulf %66, %62 : vector<8x64xf32>
    %68 = arith.mulf %67, %62 : vector<8x64xf32>
    %69 = arith.addf %62, %68 : vector<8x64xf32>
    %cst_32 = arith.constant 0.797884583 : f32
    %70 = vector.broadcast %cst_32 : f32 to vector<8x64xf32>
    %71 = arith.mulf %70, %69 : vector<8x64xf32>
    %72 = math.tanh %71 : vector<8x64xf32>
    %cst_33 = arith.constant 1.000000e+00 : f32
    %73 = vector.broadcast %cst_33 : f32 to vector<8x64xf32>
    %74 = arith.addf %73, %72 : vector<8x64xf32>
    %75 = arith.mulf %64, %74 : vector<8x64xf32>
    %76 = arith.truncf %75 : vector<8x64xf32> to vector<8x64xbf16>
    %c2 = arith.constant 2 : index
    %c0_34 = arith.constant 0 : index
    %c0_35 = arith.constant 0 : index
    %77 = vector.load %arg4[%c2, %c0_34, %c0_35] : memref<4x64x64xbf16, #tpu.memory_space<vmem>>, vector<1x64x64xbf16>
    %78 = vector.shape_cast %77 : vector<1x64x64xbf16> to vector<64x64xbf16>
    %cst_36 = arith.constant dense<0.000000e+00> : vector<8x64xf32>
    %79 = tpu.matmul %76, %78, %cst_36 {dimension_numbers = #tpu.dot_dimension_numbers<[1], [0], [0], [1], [0, 0, 1, 1], [], []>} : vector<8x64xbf16>, vector<64x64xbf16>, vector<8x64xf32> -> vector<8x64xf32>
    %c2_37 = arith.constant 2 : index
    %c0_38 = arith.constant 0 : index
    %c0_39 = arith.constant 0 : index
    %80 = vector.load %arg5[%c2_37, %c0_38, %c0_39] : memref<4x1x64xf32, #tpu.memory_space<vmem>>, vector<1x1x64xf32>
    %81 = vector.shape_cast %80 : vector<1x1x64xf32> to vector<1x64xf32>
    %82 = vector.broadcast %81 : vector<1x64xf32> to vector<8x64xf32>
    %83 = arith.addf %79, %82 : vector<8x64xf32>
    %cst_40 = arith.constant 5.000000e-01 : f32
    %84 = vector.broadcast %cst_40 : f32 to vector<8x64xf32>
    %85 = arith.mulf %84, %83 : vector<8x64xf32>
    %cst_41 = arith.constant 4.471500e-02 : f32
    %86 = vector.broadcast %cst_41 : f32 to vector<8x64xf32>
    %87 = arith.mulf %86, %83 : vector<8x64xf32>
    %88 = arith.mulf %87, %83 : vector<8x64xf32>
    %89 = arith.mulf %88, %83 : vector<8x64xf32>
    %90 = arith.addf %83, %89 : vector<8x64xf32>
    %cst_42 = arith.constant 0.797884583 : f32
    %91 = vector.broadcast %cst_42 : f32 to vector<8x64xf32>
    %92 = arith.mulf %91, %90 : vector<8x64xf32>
    %93 = math.tanh %92 : vector<8x64xf32>
    %cst_43 = arith.constant 1.000000e+00 : f32
    %94 = vector.broadcast %cst_43 : f32 to vector<8x64xf32>
    %95 = arith.addf %94, %93 : vector<8x64xf32>
    %96 = arith.mulf %85, %95 : vector<8x64xf32>
    %97 = arith.truncf %96 : vector<8x64xf32> to vector<8x64xbf16>
    %c3 = arith.constant 3 : index
    %c0_44 = arith.constant 0 : index
    %c0_45 = arith.constant 0 : index
    %98 = vector.load %arg4[%c3, %c0_44, %c0_45] : memref<4x64x64xbf16, #tpu.memory_space<vmem>>, vector<1x64x64xbf16>
    %99 = vector.shape_cast %98 : vector<1x64x64xbf16> to vector<64x64xbf16>
    %cst_46 = arith.constant dense<0.000000e+00> : vector<8x64xf32>
    %100 = tpu.matmul %97, %99, %cst_46 {dimension_numbers = #tpu.dot_dimension_numbers<[1], [0], [0], [1], [0, 0, 1, 1], [], []>} : vector<8x64xbf16>, vector<64x64xbf16>, vector<8x64xf32> -> vector<8x64xf32>
    %c3_47 = arith.constant 3 : index
    %c0_48 = arith.constant 0 : index
    %c0_49 = arith.constant 0 : index
    %101 = vector.load %arg5[%c3_47, %c0_48, %c0_49] : memref<4x1x64xf32, #tpu.memory_space<vmem>>, vector<1x1x64xf32>
    %102 = vector.shape_cast %101 : vector<1x1x64xf32> to vector<1x64xf32>
    %103 = vector.broadcast %102 : vector<1x64xf32> to vector<8x64xf32>
    %104 = arith.addf %100, %103 : vector<8x64xf32>
    %105 = arith.addf %104, %62 : vector<8x64xf32>
    %106 = arith.truncf %105 : vector<8x64xf32> to vector<8x64xbf16>
    %c0_50 = arith.constant 0 : index
    %c0_51 = arith.constant 0 : index
    %107 = vector.load %arg6[%c0_50, %c0_51] : memref<64x48xbf16, #tpu.memory_space<vmem>>, vector<64x48xbf16>
    %cst_52 = arith.constant dense<0.000000e+00> : vector<8x48xf32>
    %108 = tpu.matmul %106, %107, %cst_52 {dimension_numbers = #tpu.dot_dimension_numbers<[1], [0], [0], [1], [0, 0, 1, 1], [], []>} : vector<8x64xbf16>, vector<64x48xbf16>, vector<8x48xf32> -> vector<8x48xf32>
    %c0_53 = arith.constant 0 : index
    %c0_54 = arith.constant 0 : index
    %109 = vector.load %arg7[%c0_53, %c0_54] : memref<1x48xf32, #tpu.memory_space<vmem>>, vector<1x48xf32>
    %110 = vector.broadcast %109 : vector<1x48xf32> to vector<8x48xf32>
    %111 = arith.addf %108, %110 : vector<8x48xf32>
    %c0_55 = arith.constant 0 : index
    %c0_56 = arith.constant 0 : index
    %112 = vector.load %arg8[%c0_55, %c0_56] : memref<8x48xf32, #tpu.memory_space<vmem>>, vector<8x48xf32>
    tpu.vector_store %arg8[%c0_55, %c0_56], %111 {strides = array<i32>} : memref<8x48xf32, #tpu.memory_space<vmem>>, vector<8x48xf32>,
    return
  }
  func.func @transform_0(%arg0: i32) -> (i32, i32) {
    %c0_i32 = arith.constant 0 : i32
    %c0_i32_0 = arith.constant 0 : i32
    return %arg0, %c0_i32 : i32, i32
  }
  func.func @transform_1(%arg0: i32) -> (i32, i32) {
    %c0_i32 = arith.constant 0 : i32
    %c0_i32_0 = arith.constant 0 : i32
    %c0_i32_1 = arith.constant 0 : i32
    return %c0_i32, %c0_i32_0 : i32, i32
  }
  func.func @transform_2(%arg0: i32) -> (i32, i32) {
    %c0_i32 = arith.constant 0 : i32
    %c0_i32_0 = arith.constant 0 : i32
    %c0_i32_1 = arith.constant 0 : i32
    return %c0_i32, %c0_i32_0 : i32, i32
  }
  func.func @transform_3(%arg0: i32) -> (i32, i32, i32) {
    %c0_i32 = arith.constant 0 : i32
    %c0_i32_0 = arith.constant 0 : i32
    %c0_i32_1 = arith.constant 0 : i32
    %c0_i32_2 = arith.constant 0 : i32
    return %c0_i32, %c0_i32_0, %c0_i32_1 : i32, i32, i32
  }
  func.func @transform_4(%arg0: i32) -> (i32, i32, i32) {
    %c0_i32 = arith.constant 0 : i32
    %c0_i32_0 = arith.constant 0 : i32
    %c0_i32_1 = arith.constant 0 : i32
    %c0_i32_2 = arith.constant 0 : i32
    return %c0_i32, %c0_i32_0, %c0_i32_1 : i32, i32, i32
  }
  func.func @transform_5(%arg0: i32) -> (i32, i32) {
    %c0_i32 = arith.constant 0 : i32
    %c0_i32_0 = arith.constant 0 : i32
    %c0_i32_1 = arith.constant 0 : i32
    return %c0_i32, %c0_i32_0 : i32, i32
  }
  func.func @transform_6(%arg0: i32) -> (i32, i32) {
    %c0_i32 = arith.constant 0 : i32
    %c0_i32_0 = arith.constant 0 : i32
    %c0_i32_1 = arith.constant 0 : i32
    return %c0_i32, %c0_i32_0 : i32, i32
  }
  func.func @transform_7(%arg0: i32) -> (i32, i32) {
    %c0_i32 = arith.constant 0 : i32
    %c0_i32_0 = arith.constant 0 : i32
    return %arg0, %c0_i32 : i32, i32
  }
}

</mosaic_0001>

<llo_original>
// kernel: tpu_custom_call.1
$region0: #{tpu_custom_call.1}
  #allocation0 [shape = 'u32[]', space=smem, size = 0x4, offset = 0x4, fixed_abs, tag = 'smem constant byte address 0x4 - core index']
  #allocation1 [shape = 'u32[72,128]{1,0:T(1,128)}', space=vmem, size = 0x9000, scoped, tag = 'internal scratch']
  %s0 = inlined_call_operand.vmem [shape: f32[8,32], index: 0, kind: input, shape index: {}]
  %s1 = inlined_call_operand.vmem [shape: bf16[32,64], index: 1, kind: input, shape index: {}]
  %s2 = inlined_call_operand.vmem [shape: f32[1,64], index: 2, kind: input, shape index: {}]
  %s3 = inlined_call_operand.hbm [shape: bf16[4,64,64], index: 3, kind: input, shape index: {}]
  %s4 = inlined_call_operand.vmem [shape: f32[4,1,64], index: 4, kind: input, shape index: {}]
  %s5 = inlined_call_operand.vmem [shape: bf16[64,48], index: 5, kind: input, shape index: {}]
  %s6 = inlined_call_operand.vmem [shape: f32[1,48], index: 6, kind: input, shape index: {}]
  %s7 = inlined_call_operand.hbm [shape: f32[8,48], index: 7, kind: output, shape index: {}]
  %s8 = sld [smem:[#allocation0]]
  $region42: #{tpu_custom_call.1} parent=0
    _
  %s10 = ssub.s32 1, %s8
  %s11 = scalar_select 0, %s10, %s8
  $region1: #{tpu_custom_call.1} parent=0
    #allocation2 [shape = 'u8[65536]{0}', space=vmem, size = 0x10000, scoped, tag = 'input window, operand 3, single buffered']
    #allocation3 [shape = 's32[1]{0}', space=sflag, size = 0x4, scoped, tag = 'scoped memory for tpu_custom_call.1']
    #allocation4 [shape = 's32[1]{0}', space=sflag, size = 0x4, scoped, tag = 'scoped memory for tpu_custom_call.1']
    #allocation5 [shape = 'u8[4096]{0}', space=vmem, size = 0x1000, scoped, tag = 'output window, operand 0, single buffered']
    %12 = vsyncpa [#allocation3], 0
    %13 = vsyncpa [#allocation4], 0
    // Predicated region
    $region2: #{tpu_custom_call.1} parent=1 // pred_check
      _
    $region3: #{tpu_custom_call.1} parent=1 // pred_check_branch
      %15 = sbr.rel (0) target = $region5
    $region4: #{tpu_custom_call.1} parent=1 // pred_region
      _
    $region5: #{tpu_custom_call.1} parent=1 // pred_fallthru
      _
    // Predicated region
    $region6: #{tpu_custom_call.1} parent=1 // pred_check
      _
    $region7: #{tpu_custom_call.1} parent=1 // pred_check_branch
      %17 = sbr.rel (0) target = $region9
    $region8: #{tpu_custom_call.1} parent=1 // pred_region
      _
    $region9: #{tpu_custom_call.1} parent=1 // pred_fallthru
      _
    // Predicated region
    $region10: #{tpu_custom_call.1} parent=1 // pred_check
      _
    $region11: #{tpu_custom_call.1} parent=1 // pred_check_branch
      %19 = sbr.rel (0) target = $region13
    $region12: #{tpu_custom_call.1} parent=1 // pred_region
      _
    $region13: #{tpu_custom_call.1} parent=1 // pred_fallthru
      _
    // Predicated region
    $region14: #{tpu_custom_call.1} parent=1 // pred_check
      _
    $region15: #{tpu_custom_call.1} parent=1 // pred_check_branch
      %21 = sbr.rel (0) target = $region17
    $region16: #{tpu_custom_call.1} parent=1 // pred_region
      %23 = vsyncadd [#allocation3], 0
      %s24 = sshll.u32 %s3, 4
      %s25 = int_to_ptr.hbm [resolvable:$true] %s24
      %s26 = sshll.u32 [#allocation2], 4
      %s27 = int_to_ptr.vmem [resolvable:$true] %s26
      %32 = dma.hbm_to_vmem [thread:$0]  %s25, 2048, %s27, [#allocation3], 64, 64, 4
    $region17: #{tpu_custom_call.1} parent=1 // pred_fallthru
      _
    // Predicated region
    $region18: #{tpu_custom_call.1} parent=1 // pred_check
      _
    $region19: #{tpu_custom_call.1} parent=1 // pred_check_branch
      %34 = sbr.rel (0) target = $region21
    $region20: #{tpu_custom_call.1} parent=1 // pred_region
      _
    $region21: #{tpu_custom_call.1} parent=1 // pred_fallthru
      _
    // Predicated region
    $region22: #{tpu_custom_call.1} parent=1 // pred_check
      _
    $region23: #{tpu_custom_call.1} parent=1 // pred_check_branch
      %36 = sbr.rel (0) target = $region25
    $region24: #{tpu_custom_call.1} parent=1 // pred_region
      _
    $region25: #{tpu_custom_call.1} parent=1 // pred_fallthru
      _
    // Predicated region
    $region26: #{tpu_custom_call.1} parent=1 // pred_check
      _
    $region27: #{tpu_custom_call.1} parent=1 // pred_check_branch
      %38 = sbr.rel (0) target = $region29
    $region28: #{tpu_custom_call.1} parent=1 // pred_region
      _
    $region29: #{tpu_custom_call.1} parent=1 // pred_fallthru
      _
    // Predicated region
    $region30: #{tpu_custom_call.1} parent=1 // pred_check
      _
    $region31: #{tpu_custom_call.1} parent=1 // pred_check_branch
      %40 = sbr.rel (0) target = $region33
    $region32: #{tpu_custom_call.1} parent=1 // pred_region
      %42 = dma.done [#allocation3], 2048
    $region33: #{tpu_custom_call.1} parent=1 // pred_fallthru
      _
    %v44 = vld [vmem:[%s0] sm:$0xff]
    %v45 = vpack.c.bf16 %v44, %v44
    %v46 = vld [vmem:[%s1] sm:$0xf]
    %v47 = vld [vmem:[%s1 + $0x4] sm:$0xf]
    %v48 = vld [vmem:[%s1 + $0x8] sm:$0xf]
    %v49 = vld [vmem:[%s1 + $0xc] sm:$0xf]
    %v50 = vld [vmem:[%s2] sm:$0x1]
    %v52 = vperm.slane %v50, 0
    %v58 = vunpack.c.l.b16 %v46
    %v59 = vunpack.c.l.b16 %v47
    %v60 = vunpack.c.l.b16 %v48
    %v61 = vunpack.c.l.b16 %v49
    %v62 = vpack.c.b16 %v59, %v58
    %v63 = vpack.c.b16 %v61, %v60
    %vm66 = vcmask 261120
    %v68 = vsel %vm66, %v45, 0
    %70 = vmatpush.bf16.msra.mxu0 0
    %71 = vmatpush.bf16.msra.mxu0 0
    %72 = vmatpush.bf16.msra.mxu0 0
    %73 = vmatpush.bf16.msra.mxu0 0
    %74 = vmatpush.bf16.msra.mxu0 0
    %75 = vmatpush.bf16.msra.mxu0 0
    %76 = vmatpush.bf16.msra.mxu0 %v63
    %77 = vmatpush.bf16.msra.mxu0 %v62
    %78 = vmatmul.bf16.gmra.mxu0 %v68
    %v79 = vpop.f32.mrf.mxu0
    %v80 = vadd.f32 %v52, %v79
    %v81 = vpop.f32.mrf.mxu0
    %82 = vdwg.mxu0
    %v83 = vmul.f32 %v80, 0.5
    %v84 = vmul.f32 %v80, 0.044715
    %v85 = vmul.f32 %v84, %v80
    %v86 = vmul.f32 %v85, %v80
    %v87 = vadd.f32 %v80, %v86
    %v88 = vmul.f32 %v87, 0.7978846
    %v89 = vtanh.pop %v88
    %v90 = vadd.f32 %v89, 1.0
    %v91 = vmul.f32 %v83, %v90
    %v92 = vmul.f32 %v91, 0.5
    %v93 = vmul.f32 %v91, 0.044715
    %v94 = vmul.f32 %v93, %v91
    %v95 = vmul.f32 %v94, %v91
    %v96 = vadd.f32 %v91, %v95
    %v97 = vmul.f32 %v96, 0.7978846
    %v98 = vtanh.pop %v97
    %v99 = vadd.f32 %v98, 1.0
    %v100 = vmul.f32 %v92, %v99
    %v101 = vpack.c.bf16 %v100, %v100
    %v102 = vld [vmem:[#allocation2] sm:$0xf]
    %v103 = vld [vmem:[#allocation2 + $0x4] sm:$0xf]
    %v104 = vld [vmem:[#allocation2 + $0x8] sm:$0xf]
    %v105 = vld [vmem:[#allocation2 + $0xc] sm:$0xf]
    %v106 = vld [vmem:[#allocation2 + $0x10] sm:$0xf]
    %v107 = vld [vmem:[#allocation2 + $0x14] sm:$0xf]
    %v108 = vld [vmem:[#allocation2 + $0x18] sm:$0xf]
    %v109 = vld [vmem:[#allocation2 + $0x1c] sm:$0xf]
    %v110 = vld [vmem:[%s4] sm:$0x1]
    %v112 = vperm.slane %v110, 0
    %v122 = vunpack.c.l.b16 %v102
    %v123 = vunpack.c.l.b16 %v103
    %v124 = vunpack.c.l.b16 %v104
    %v125 = vunpack.c.l.b16 %v105
    %v126 = vunpack.c.l.b16 %v106
    %v127 = vunpack.c.l.b16 %v107
    %v128 = vunpack.c.l.b16 %v108
    %v129 = vunpack.c.l.b16 %v109
    %v130 = vpack.c.b16 %v123, %v122
    %v131 = vpack.c.b16 %v125, %v124
    %v132 = vpack.c.b16 %v127, %v126
    %v133 = vpack.c.b16 %v129, %v128
    %vm138 = vcmask 523264
    %v140 = vsel %vm138, %v101, 0
    %142 = vmatpush.bf16.msra.mxu0 0
    %143 = vmatpush.bf16.msra.mxu0 0
    %144 = vmatpush.bf16.msra.mxu0 0
    %145 = vmatpush.bf16.msra.mxu0 0
    %146 = vmatpush.bf16.msra.mxu0 %v133
    %147 = vmatpush.bf16.msra.mxu0 %v132
    %148 = vmatpush.bf16.msra.mxu0 %v131
    %149 = vmatpush.bf16.msra.mxu0 %v130
    %150 = vmatmul.bf16.gmra.mxu0 %v140
    %v151 = vpop.f32.mrf.mxu0
    %v152 = vadd.f32 %v112, %v151
    %v153 = vpop.f32.mrf.mxu0
    %154 = vdwg.mxu0
    %v155 = vmul.f32 %v152, 0.5
    %v156 = vmul.f32 %v152, 0.044715
    %v157 = vmul.f32 %v156, %v152
    %v158 = vmul.f32 %v157, %v152
    %v159 = vadd.f32 %v152, %v158
    %v160 = vmul.f32 %v159, 0.7978846
    %v161 = vtanh.pop %v160
    %v162 = vadd.f32 %v161, 1.0
    %v163 = vmul.f32 %v155, %v162
    %v164 = vpack.c.bf16 %v163, %v163
    %s165 = scalar_lea.vmem [#allocation2], 32
    %v166 = vld [vmem:[%s165] sm:$0xf]
    %v167 = vld [vmem:[%s165 + $0x4] sm:$0xf]
    %v168 = vld [vmem:[%s165 + $0x8] sm:$0xf]
    %v169 = vld [vmem:[%s165 + $0xc] sm:$0xf]
    %v170 = vld [vmem:[%s165 + $0x10] sm:$0xf]
    %v171 = vld [vmem:[%s165 + $0x14] sm:$0xf]
    %v172 = vld [vmem:[%s165 + $0x18] sm:$0xf]
    %v173 = vld [vmem:[%s165 + $0x1c] sm:$0xf]
    %s174 = scalar_lea.vmem %s4, 1
    %v175 = vld [vmem:[%s174] sm:$0x1]
    %v177 = vperm.slane %v175, 0
    %v187 = vunpack.c.l.b16 %v166
    %v188 = vunpack.c.l.b16 %v167
    %v189 = vunpack.c.l.b16 %v168
    %v190 = vunpack.c.l.b16 %v169
    %v191 = vunpack.c.l.b16 %v170
    %v192 = vunpack.c.l.b16 %v171
    %v193 = vunpack.c.l.b16 %v172
    %v194 = vunpack.c.l.b16 %v173
    %v195 = vpack.c.b16 %v188, %v187
    %v196 = vpack.c.b16 %v190, %v189
    %v197 = vpack.c.b16 %v192, %v191
    %v198 = vpack.c.b16 %v194, %v193
    %v204 = vsel %vm138, %v164, 0
    %206 = vmatpush.bf16.msra.mxu0 0
    %207 = vmatpush.bf16.msra.mxu0 0
    %208 = vmatpush.bf16.msra.mxu0 0
    %209 = vmatpush.bf16.msra.mxu0 0
    %210 = vmatpush.bf16.msra.mxu0 %v198
    %211 = vmatpush.bf16.msra.mxu0 %v197
    %212 = vmatpush.bf16.msra.mxu0 %v196
    %213 = vmatpush.bf16.msra.mxu0 %v195
    %214 = vmatmul.bf16.gmra.mxu0 %v204
    %v215 = vpop.f32.mrf.mxu0
    %v216 = vadd.f32 %v177, %v215
    %v217 = vpop.f32.mrf.mxu0
    %218 = vdwg.mxu0
    %v219 = vadd.f32 %v216, %v91
    %v220 = vmul.f32 %v219, 0.5
    %v221 = vmul.f32 %v219, 0.044715
    %v222 = vmul.f32 %v221, %v219
    %v223 = vmul.f32 %v222, %v219
    %v224 = vadd.f32 %v219, %v223
    %v225 = vmul.f32 %v224, 0.7978846
    %v226 = vtanh.pop %v225
    %v227 = vadd.f32 %v226, 1.0
    %v228 = vmul.f32 %v220, %v227
    %v229 = vpack.c.bf16 %v228, %v228
    %s230 = scalar_lea.vmem [#allocation2], 64
    %v231 = vld [vmem:[%s230] sm:$0xf]
    %v232 = vld [vmem:[%s230 + $0x4] sm:$0xf]
    %v233 = vld [vmem:[%s230 + $0x8] sm:$0xf]
    %v234 = vld [vmem:[%s230 + $0xc] sm:$0xf]
    %v235 = vld [vmem:[%s230 + $0x10] sm:$0xf]
    %v236 = vld [vmem:[%s230 + $0x14] sm:$0xf]
    %v237 = vld [vmem:[%s230 + $0x18] sm:$0xf]
    %v238 = vld [vmem:[%s230 + $0x1c] sm:$0xf]
    %s239 = scalar_lea.vmem %s4, 2
    %v240 = vld [vmem:[%s239] sm:$0x1]
    %v242 = vperm.slane %v240, 0
    %v252 = vunpack.c.l.b16 %v231
    %v253 = vunpack.c.l.b16 %v232
    %v254 = vunpack.c.l.b16 %v233
    %v255 = vunpack.c.l.b16 %v234
    %v256 = vunpack.c.l.b16 %v235
    %v257 = vunpack.c.l.b16 %v236
    %v258 = vunpack.c.l.b16 %v237
    %v259 = vunpack.c.l.b16 %v238
    %v260 = vpack.c.b16 %v253, %v252
    %v261 = vpack.c.b16 %v255, %v254
    %v262 = vpack.c.b16 %v257, %v256
    %v263 = vpack.c.b16 %v259, %v258
    %v269 = vsel %vm138, %v229, 0
    %271 = vmatpush.bf16.msra.mxu0 0
    %272 = vmatpush.bf16.msra.mxu0 0
    %273 = vmatpush.bf16.msra.mxu0 0
    %274 = vmatpush.bf16.msra.mxu0 0
    %275 = vmatpush.bf16.msra.mxu0 %v263
    %276 = vmatpush.bf16.msra.mxu0 %v262
    %277 = vmatpush.bf16.msra.mxu0 %v261
    %278 = vmatpush.bf16.msra.mxu0 %v260
    %279 = vmatmul.bf16.gmra.mxu0 %v269
    %v280 = vpop.f32.mrf.mxu0
    %v281 = vadd.f32 %v242, %v280
    %v282 = vpop.f32.mrf.mxu0
    %283 = vdwg.mxu0
    %v284 = vmul.f32 %v281, 0.5
    %v285 = vmul.f32 %v281, 0.044715
    %v286 = vmul.f32 %v285, %v281
    %v287 = vmul.f32 %v286, %v281
    %v288 = vadd.f32 %v281, %v287
    %v289 = vmul.f32 %v288, 0.7978846
    %v290 = vtanh.pop %v289
    %v291 = vadd.f32 %v290, 1.0
    %v292 = vmul.f32 %v284, %v291
    %v293 = vpack.c.bf16 %v292, %v292
    %s294 = scalar_lea.vmem [#allocation2], 96
    %v295 = vld [vmem:[%s294] sm:$0xf]
    %v296 = vld [vmem:[%s294 + $0x4] sm:$0xf]
    %v297 = vld [vmem:[%s294 + $0x8] sm:$0xf]
    %v298 = vld [vmem:[%s294 + $0xc] sm:$0xf]
    %v299 = vld [vmem:[%s294 + $0x10] sm:$0xf]
    %v300 = vld [vmem:[%s294 + $0x14] sm:$0xf]
    %v301 = vld [vmem:[%s294 + $0x18] sm:$0xf]
    %v302 = vld [vmem:[%s294 + $0x1c] sm:$0xf]
    %s303 = scalar_lea.vmem %s4, 3
    %v304 = vld [vmem:[%s303] sm:$0x1]
    %v306 = vperm.slane %v304, 0
    %v316 = vunpack.c.l.b16 %v295
    %v317 = vunpack.c.l.b16 %v296
    %v318 = vunpack.c.l.b16 %v297
    %v319 = vunpack.c.l.b16 %v298
    %v320 = vunpack.c.l.b16 %v299
    %v321 = vunpack.c.l.b16 %v300
    %v322 = vunpack.c.l.b16 %v301
    %v323 = vunpack.c.l.b16 %v302
    %v324 = vpack.c.b16 %v317, %v316
    %v325 = vpack.c.b16 %v319, %v318
    %v326 = vpack.c.b16 %v321, %v320
    %v327 = vpack.c.b16 %v323, %v322
    %v333 = vsel %vm138, %v293, 0
    %335 = vmatpush.bf16.msra.mxu0 0
    %336 = vmatpush.bf16.msra.mxu0 0
    %337 = vmatpush.bf16.msra.mxu0 0
    %338 = vmatpush.bf16.msra.mxu0 0
    %339 = vmatpush.bf16.msra.mxu0 %v327
    %340 = vmatpush.bf16.msra.mxu0 %v326
    %341 = vmatpush.bf16.msra.mxu0 %v325
    %342 = vmatpush.bf16.msra.mxu0 %v324
    %343 = vmatmul.bf16.gmra.mxu0 %v333
    %v344 = vpop.f32.mrf.mxu0
    %v345 = vadd.f32 %v306, %v344
    %v346 = vpop.f32.mrf.mxu0
    %347 = vdwg.mxu0
    %v348 = vadd.f32 %v345, %v219
    %v349 = vpack.c.bf16 %v348, %v348
    %v350 = vld [vmem:[%s5] sm:$0xf]
    %v351 = vld [vmem:[%s5 + $0x4] sm:$0xf]
    %v352 = vld [vmem:[%s5 + $0x8] sm:$0xf]
    %v353 = vld [vmem:[%s5 + $0xc] sm:$0xf]
    %v354 = vld [vmem:[%s5 + $0x10] sm:$0xf]
    %v355 = vld [vmem:[%s5 + $0x14] sm:$0xf]
    %v356 = vld [vmem:[%s5 + $0x18] sm:$0xf]
    %v357 = vld [vmem:[%s5 + $0x1c] sm:$0xf]
    %v358 = vld [vmem:[%s6] sm:$0x1]
    %v360 = vperm.slane %v358, 0
    %v370 = vunpack.c.l.b16 %v350
    %v371 = vunpack.c.l.b16 %v351
    %v372 = vunpack.c.l.b16 %v352
    %v373 = vunpack.c.l.b16 %v353
    %v374 = vunpack.c.l.b16 %v354
    %v375 = vunpack.c.l.b16 %v355
    %v376 = vunpack.c.l.b16 %v356
    %v377 = vunpack.c.l.b16 %v357
    %v378 = vpack.c.b16 %v371, %v370
    %v379 = vpack.c.b16 %v373, %v372
    %v380 = vpack.c.b16 %v375, %v374
    %v381 = vpack.c.b16 %v377, %v376
    %v387 = vsel %vm138, %v349, 0
    %389 = vmatpush.bf16.msra.mxu0 0
    %390 = vmatpush.bf16.msra.mxu0 0
    %391 = vmatpush.bf16.msra.mxu0 0
    %392 = vmatpush.bf16.msra.mxu0 0
    %393 = vmatpush.bf16.msra.mxu0 %v381
    %394 = vmatpush.bf16.msra.mxu0 %v380
    %395 = vmatpush.bf16.msra.mxu0 %v379
    %396 = vmatpush.bf16.msra.mxu0 %v378
    %397 = vmatmul.bf16.gmra.mxu0 %v387
    %v398 = vpop.f32.mrf.mxu0
    %v399 = vadd.f32 %v360, %v398
    %v400 = vpop.f32.mrf.mxu0
    %401 = vdwg.mxu0
    %vm402 = vcmask 392192
    %403 = vst.msk [vmem:[#allocation5] sm:$0xff] %vm402, %v399
    // Predicated region
    $region34: #{tpu_custom_call.1} parent=1 // pred_check
      _
    $region35: #{tpu_custom_call.1} parent=1 // pred_check_branch
      %405 = sbr.rel (0) target = $region37
    $region36: #{tpu_custom_call.1} parent=1 // pred_region
      %407 = vsyncadd [#allocation4], 0
      %s409 = sshll.u32 [#allocation5], 4
      %s410 = int_to_ptr.vmem [resolvable:$true] %s409
      %s411 = sshll.u32 %s7, 4
      %s412 = int_to_ptr.hbm [resolvable:$true] %s411
      %414 = dma.vmem_to_hbm [thread:$0]  %s410, 128, %s412, [#allocation4]
    $region37: #{tpu_custom_call.1} parent=1 // pred_fallthru
      _
    // Predicated region
    $region38: #{tpu_custom_call.1} parent=1 // pred_check
      _
    $region39: #{tpu_custom_call.1} parent=1 // pred_check_branch
      %416 = sbr.rel (0) target = $region41
    $region40: #{tpu_custom_call.1} parent=1 // pred_region
      %418 = dma.done [#allocation4], 128
    $region41: #{tpu_custom_call.1} parent=1 // pred_fallthru
      _
    %419 = vsyncpa [#allocation3], 1
    %420 = vsyncpa [#allocation4], 1

</llo_original>
